<compile_context>
chip_gen: v7x
topology: tpu7x:2x2x1
jax: 0.10.0
libtpu: 0.0.40
codegen_flags: <defaults>
</compile_context>

<pallas_src>
import jax
import jax.numpy as jnp
from jax.experimental import pallas as pl
from jax.experimental.pallas import tpu as pltpu


def _round_up(x: int, m: int) -> int:
    return ((x + m - 1) // m) * m


def _pad_axis(a, axis: int, size: int):
    pad = size - a.shape[axis]
    if pad == 0:
        return a
    widths = [(0, 0)] * a.ndim
    widths[axis] = (0, pad)
    return jnp.pad(a, widths)


def _choose_tb(B: int) -> int:
    # At least 2 grid steps once B >= 16 (v7x dual-TC sharding of the
    # "parallel" axis); cap at 512 so large B on single-TC v5e/v6e still
    # amortizes per-step pipeline overhead with a modest VMEM footprint.
    tb = _round_up(max(1, -(-B // 2)), 8)
    return min(512, tb)


def _encoder_kernel(ke_ref, d_ref, nmask_ref,
                    w1x_ref, w1d_ref, b1_ref, w2_ref, b2_ref, out_ref):
    """One block of TB batch elements per grid step.

    ke_ref    : (TB*N, Din)   dim-masked kernel embeddings (pre-flattened)
    d_ref     : (TB, Denc)    dataset embeddings
    nmask_ref : (TB, N)       kernel_mask / max(sum(kernel_mask), 1)
    w1x_ref   : (Din,  Hp)    layer-1 weights acting on kernel embeddings
    w1d_ref   : (Denc, Hp)    layer-1 weights acting on dataset embedding
    b1_ref    : (1, Hp)
    w2_ref    : (Hp, Hp)
    b2_ref    : (1, Hp)
    out_ref   : (TB, Hp)
    """
    TB, N = nmask_ref.shape
    Hp = out_ref.shape[-1]

    # Layer 1, token part: one (TB*N, Din) @ (Din, Hp) MXU matmul.
    h = jnp.dot(ke_ref[...], w1x_ref[...],
                preferred_element_type=jnp.float32).reshape(TB, N, Hp)

    # Layer 1, dataset part (+ bias): computed once per batch element.
    d_h = jnp.dot(d_ref[...], w1d_ref[...],
                  preferred_element_type=jnp.float32) + b1_ref[...]     # (TB, Hp)

    h = jnp.maximum(h + d_h[:, None, :], 0.0)                           # (TB, N, Hp)

    # Masked mean pooling on the VPU/XLU: multiply + sublane reduce.
    # Each (N=const, Hp=128) f32 slice is a handful of vregs; no MXU pushes.
    nm = nmask_ref[...]                                                  # (TB, N)
    pooled = jnp.sum(h * nm[:, :, None], axis=1)                         # (TB, Hp)

    # Layer 2 commutes with the (linear) weighted pooling:
    #   sum_n nm[b,n] * (h[b,n] @ W2 + b2) = pooled[b] @ W2 + (sum_n nm[b,n]) * b2
    msum = jnp.sum(nm, axis=1, keepdims=True)                            # (TB, 1)
    out = jnp.dot(pooled, w2_ref[...],
                  preferred_element_type=jnp.float32) + msum * b2_ref[...]
    out_ref[...] = out.astype(out_ref.dtype)


def kernel_encoder_forward(kernel_embeddings, dataset_embeddings,
                           kernel_mask, dim_mask, params):
    """Wrapper: padding / masking / weight splitting / mask normalization
    (all O(B*N*Din) or O(params) work, fused by XLA); the MLP + masked
    pooling run inside the Pallas kernel."""
    w1, b1, w2, b2 = params
    B, N, input_dim = kernel_embeddings.shape
    dataset_enc_dim = dataset_embeddings.shape[-1]
    hidden_dim = w1.shape[-1]
    f32 = jnp.float32

    # Lane-dense hidden dim (zero padding keeps the math exact).
    Hp = _round_up(max(hidden_dim, 128), 128)
    TB = _choose_tb(B)
    Bp = _round_up(B, TB)

    # Dim-mask fold + batch pad + flatten (B*N, Din) in the wrapper.
    ke = kernel_embeddings.astype(f32) * dim_mask.astype(f32)[:, None, :]
    ke = _pad_axis(ke, 0, Bp).reshape(Bp * N, input_dim)                 # (Bp*N, Din)
    de = _pad_axis(dataset_embeddings.astype(f32), 0, Bp)                # (Bp, Denc)
    km = _pad_axis(kernel_mask.astype(f32), 0, Bp)                       # (Bp, N)

    # Pre-normalized pooling mask: masked mean folded into the mask.
    denom = jnp.maximum(jnp.sum(km, axis=1, keepdims=True), 1.0)
    nmask = km / denom                                                   # (Bp, N)

    # Split W1 (token part / dataset part) and zero-pad everything to Hp.
    w1x = _pad_axis(w1[:input_dim].astype(f32), 1, Hp)                   # (Din,  Hp)
    w1d = _pad_axis(w1[input_dim:].astype(f32), 1, Hp)                   # (Denc, Hp)
    b1p = _pad_axis(b1.reshape(1, -1).astype(f32), 1, Hp)                # (1, Hp)
    w2p = _pad_axis(_pad_axis(w2.astype(f32), 0, Hp), 1, Hp)             # (Hp, Hp)
    b2p = _pad_axis(b2.reshape(1, -1).astype(f32), 1, Hp)                # (1, Hp)

    out = pl.pallas_call(
        _encoder_kernel,
        out_shape=jax.ShapeDtypeStruct((Bp, Hp), f32),
        grid_spec=pltpu.PrefetchScalarGridSpec(
            num_scalar_prefetch=0,
            grid=(Bp // TB,),
            in_specs=[
                pl.BlockSpec((TB * N, input_dim), lambda g: (g, 0)),
                pl.BlockSpec((TB, dataset_enc_dim), lambda g: (g, 0)),
                pl.BlockSpec((TB, N), lambda g: (g, 0)),
                pl.BlockSpec((input_dim, Hp), lambda g: (0, 0)),
                pl.BlockSpec((dataset_enc_dim, Hp), lambda g: (0, 0)),
                pl.BlockSpec((1, Hp), lambda g: (0, 0)),
                pl.BlockSpec((Hp, Hp), lambda g: (0, 0)),
                pl.BlockSpec((1, Hp), lambda g: (0, 0)),
            ],
            out_specs=pl.BlockSpec((TB, Hp), lambda g: (g, 0)),
        ),
        compiler_params=pltpu.CompilerParams(
            dimension_semantics=("parallel",)),
    )(ke, de, nmask, w1x, w1d, b1p, w2p, b2p)

    return out[:B, :hidden_dim]


def _reference(kernel_embeddings, dataset_embeddings, kernel_mask, dim_mask, params):
    w1, b1, w2, b2 = params
    B, N, _ = kernel_embeddings.shape
    x = kernel_embeddings * dim_mask[:, None, :]
    d = jnp.broadcast_to(dataset_embeddings[:, None, :],
                         (B, N, dataset_embeddings.shape[-1]))
    feats = jnp.concatenate([x, d], axis=-1).astype(jnp.float32)
    h = jnp.maximum(feats @ w1 + b1, 0.0)
    h = h @ w2 + b2
    m = kernel_mask[:, :, None].astype(jnp.float32)
    return jnp.sum(h * m, axis=1) / jnp.maximum(jnp.sum(m, axis=1), 1.0)


if __name__ == "__main__":
    # Small shapes consistent with the module's constructor args.
    B = 2                # batch
    N = 8                # number of kernel-expression tokens
    input_dim = 8
    dataset_enc_dim = 24
    hidden_dim = 32
    F = input_dim + dataset_enc_dim

    key = jax.random.PRNGKey(0)
    k1, k2, k3, k4, k5, k6 = jax.random.split(key, 6)

    kernel_embeddings = jax.random.normal(k1, (B, N, input_dim), dtype=jnp.float32)
    dataset_embeddings = jax.random.normal(k2, (B, dataset_enc_dim), dtype=jnp.float32)
    kernel_mask = (jax.random.uniform(k3, (B, N)) > 0.25).astype(jnp.float32)
    dim_mask = (jax.random.uniform(k4, (B, input_dim)) > 0.25).astype(jnp.float32)

    # Deterministic parameter init (synthetic, no checkpoint load).
    w1 = jax.random.normal(k5, (F, hidden_dim), dtype=jnp.float32) * 0.1
    b1 = jnp.zeros((1, hidden_dim), dtype=jnp.float32)
    w2 = jax.random.normal(k6, (hidden_dim, hidden_dim), dtype=jnp.float32) * 0.1
    b2 = jnp.zeros((1, hidden_dim), dtype=jnp.float32)
    params = (w1, b1, w2, b2)

    out = kernel_encoder_forward(kernel_embeddings, dataset_embeddings,
                                 kernel_mask, dim_mask, params)
    out = jax.block_until_ready(out)

    ref = _reference(kernel_embeddings, dataset_embeddings,
                     kernel_mask, dim_mask, params)
    assert out.shape == (B, hidden_dim)
    assert jnp.allclose(out, ref, atol=1e-4, rtol=1e-4), "mismatch vs JAX reference"

    print("KERNEL_OK")
</pallas_src>

<mosaic_0001>
module attributes {stable_mosaic.version = 11 : i64} {
  func.func @_encoder_kernel(%arg0: i32, %arg1: memref<64x8xf32, #tpu.memory_space<vmem>>, %arg2: memref<8x24xf32, #tpu.memory_space<vmem>>, %arg3: memref<8x8xf32, #tpu.memory_space<vmem>>, %arg4: memref<8x128xf32, #tpu.memory_space<vmem>>, %arg5: memref<24x128xf32, #tpu.memory_space<vmem>>, %arg6: memref<1x128xf32, #tpu.memory_space<vmem>>, %arg7: memref<128x128xf32, #tpu.memory_space<vmem>>, %arg8: memref<1x128xf32, #tpu.memory_space<vmem>>, %arg9: memref<8x128xf32, #tpu.memory_space<vmem>>) attributes {dimension_semantics = [#tpu.dimension_semantics<parallel>], iteration_bounds = array<i64: 1>, scalar_prefetch = 0 : i64, scratch_operands = 0 : i64, tpu.core_type = #tpu.core_type<tc>, window_params = [{transform_indices = @transform_0, window_bounds = array<i64: 64, 8>}, {transform_indices = @transform_1, window_bounds = array<i64: 8, 24>}, {transform_indices = @transform_2, window_bounds = array<i64: 8, 8>}, {pipeline_mode = #tpu.pipeline_mode<synchronous>, transform_indices = @transform_3, window_bounds = array<i64: 8, 128>}, {pipeline_mode = #tpu.pipeline_mode<synchronous>, transform_indices = @transform_4, window_bounds = array<i64: 24, 128>}, {pipeline_mode = #tpu.pipeline_mode<synchronous>, transform_indices = @transform_5, window_bounds = array<i64: 1, 128>}, {pipeline_mode = #tpu.pipeline_mode<synchronous>, transform_indices = @transform_6, window_bounds = array<i64: 128, 128>}, {pipeline_mode = #tpu.pipeline_mode<synchronous>, transform_indices = @transform_7, window_bounds = array<i64: 1, 128>}, {transform_indices = @transform_8, window_bounds = array<i64: 8, 128>}]} {
    %c0 = arith.constant 0 : index
    %c0_0 = arith.constant 0 : index
    %0 = vector.load %arg1[%c0, %c0_0] : memref<64x8xf32, #tpu.memory_space<vmem>>, vector<64x8xf32>
    %c0_1 = arith.constant 0 : index
    %c0_2 = arith.constant 0 : index
    %1 = vector.load %arg4[%c0_1, %c0_2] : memref<8x128xf32, #tpu.memory_space<vmem>>, vector<8x128xf32>
    %cst = arith.constant dense<0.000000e+00> : vector<64x128xf32>
    %2 = tpu.matmul %0, %1, %cst {dimension_numbers = #tpu.dot_dimension_numbers<[1], [0], [0], [1], [0, 0, 1, 1], [], []>} : vector<64x8xf32>, vector<8x128xf32>, vector<64x128xf32> -> vector<64x128xf32>
    %3 = vector.shape_cast %2 : vector<64x128xf32> to vector<8x8x128xf32>
    %c0_3 = arith.constant 0 : index
    %c0_4 = arith.constant 0 : index
    %4 = vector.load %arg2[%c0_3, %c0_4] : memref<8x24xf32, #tpu.memory_space<vmem>>, vector<8x24xf32>
    %c0_5 = arith.constant 0 : index
    %c0_6 = arith.constant 0 : index
    %5 = vector.load %arg5[%c0_5, %c0_6] : memref<24x128xf32, #tpu.memory_space<vmem>>, vector<24x128xf32>
    %cst_7 = arith.constant dense<0.000000e+00> : vector<8x128xf32>
    %6 = tpu.matmul %4, %5, %cst_7 {dimension_numbers = #tpu.dot_dimension_numbers<[1], [0], [0], [1], [0, 0, 1, 1], [], []>} : vector<8x24xf32>, vector<24x128xf32>, vector<8x128xf32> -> vector<8x128xf32>
    %c0_8 = arith.constant 0 : index
    %c0_9 = arith.constant 0 : index
    %7 = vector.load %arg6[%c0_8, %c0_9] : memref<1x128xf32, #tpu.memory_space<vmem>>, vector<1x128xf32>
    %8 = vector.broadcast %7 : vector<1x128xf32> to vector<8x128xf32>
    %9 = arith.addf %6, %8 : vector<8x128xf32>
    %10 = vector.shape_cast %9 : vector<8x128xf32> to vector<8x1x128xf32>
    %11 = vector.broadcast %10 : vector<8x1x128xf32> to vector<8x8x128xf32>
    %12 = arith.addf %3, %11 : vector<8x8x128xf32>
    %cst_10 = arith.constant 0.000000e+00 : f32
    %13 = vector.broadcast %cst_10 : f32 to vector<8x8x128xf32>
    %14 = arith.maximumf %12, %13 : vector<8x8x128xf32>
    %c0_11 = arith.constant 0 : index
    %c0_12 = arith.constant 0 : index
    %15 = vector.load %arg3[%c0_11, %c0_12] : memref<8x8xf32, #tpu.memory_space<vmem>>, vector<8x8xf32>
    %16 = vector.shape_cast %15 : vector<8x8xf32> to vector<8x8x1xf32>
    %17 = vector.broadcast %16 : vector<8x8x1xf32> to vector<8x8x128xf32>
    %18 = arith.mulf %14, %17 : vector<8x8x128xf32>
    %cst_13 = arith.constant dense<0.000000e+00> : vector<8x128xf32>
    %19 = vector.multi_reduction <add>, %18, %cst_13 [1] : vector<8x8x128xf32> to vector<8x128xf32>
    %cst_14 = arith.constant dense<0.000000e+00> : vector<8xf32>
    %20 = vector.multi_reduction <add>, %15, %cst_14 [1] : vector<8x8xf32> to vector<8xf32>
    %21 = vector.shape_cast %20 : vector<8xf32> to vector<8x1xf32>
    %c0_15 = arith.constant 0 : index
    %c0_16 = arith.constant 0 : index
    %22 = vector.load %arg7[%c0_15, %c0_16] : memref<128x128xf32, #tpu.memory_space<vmem>>, vector<128x128xf32>
    %cst_17 = arith.constant dense<0.000000e+00> : vector<8x128xf32>
    %23 = tpu.matmul %19, %22, %cst_17 {dimension_numbers = #tpu.dot_dimension_numbers<[1], [0], [0], [1], [0, 0, 1, 1], [], []>} : vector<8x128xf32>, vector<128x128xf32>, vector<8x128xf32> -> vector<8x128xf32>
    %c0_18 = arith.constant 0 : index
    %c0_19 = arith.constant 0 : index
    %24 = vector.load %arg8[%c0_18, %c0_19] : memref<1x128xf32, #tpu.memory_space<vmem>>, vector<1x128xf32>
    %25 = vector.broadcast %21 : vector<8x1xf32> to vector<8x128xf32>
    %26 = vector.broadcast %24 : vector<1x128xf32> to vector<8x128xf32>
    %27 = arith.mulf %25, %26 : vector<8x128xf32>
    %28 = arith.addf %23, %27 : vector<8x128xf32>
    %c0_20 = arith.constant 0 : index
    %c0_21 = arith.constant 0 : index
    %29 = vector.load %arg9[%c0_20, %c0_21] : memref<8x128xf32, #tpu.memory_space<vmem>>, vector<8x128xf32>
    tpu.vector_store %arg9[%c0_20, %c0_21], %28 {strides = array<i32>} : memref<8x128xf32, #tpu.memory_space<vmem>>, vector<8x128xf32>,
    return
  }
  func.func @transform_0(%arg0: i32) -> (i32, i32) {
    %c0_i32 = arith.constant 0 : i32
    %c0_i32_0 = arith.constant 0 : i32
    return %arg0, %c0_i32 : i32, i32
  }
  func.func @transform_1(%arg0: i32) -> (i32, i32) {
    %c0_i32 = arith.constant 0 : i32
    %c0_i32_0 = arith.constant 0 : i32
    return %arg0, %c0_i32 : i32, i32
  }
  func.func @transform_2(%arg0: i32) -> (i32, i32) {
    %c0_i32 = arith.constant 0 : i32
    %c0_i32_0 = arith.constant 0 : i32
    return %arg0, %c0_i32 : i32, i32
  }
  func.func @transform_3(%arg0: i32) -> (i32, i32) {
    %c0_i32 = arith.constant 0 : i32
    %c0_i32_0 = arith.constant 0 : i32
    %c0_i32_1 = arith.constant 0 : i32
    return %c0_i32, %c0_i32_0 : i32, i32
  }
  func.func @transform_4(%arg0: i32) -> (i32, i32) {
    %c0_i32 = arith.constant 0 : i32
    %c0_i32_0 = arith.constant 0 : i32
    %c0_i32_1 = arith.constant 0 : i32
    return %c0_i32, %c0_i32_0 : i32, i32
  }
  func.func @transform_5(%arg0: i32) -> (i32, i32) {
    %c0_i32 = arith.constant 0 : i32
    %c0_i32_0 = arith.constant 0 : i32
    %c0_i32_1 = arith.constant 0 : i32
    return %c0_i32, %c0_i32_0 : i32, i32
  }
  func.func @transform_6(%arg0: i32) -> (i32, i32) {
    %c0_i32 = arith.constant 0 : i32
    %c0_i32_0 = arith.constant 0 : i32
    %c0_i32_1 = arith.constant 0 : i32
    return %c0_i32, %c0_i32_0 : i32, i32
  }
  func.func @transform_7(%arg0: i32) -> (i32, i32) {
    %c0_i32 = arith.constant 0 : i32
    %c0_i32_0 = arith.constant 0 : i32
    %c0_i32_1 = arith.constant 0 : i32
    return %c0_i32, %c0_i32_0 : i32, i32
  }
  func.func @transform_8(%arg0: i32) -> (i32, i32) {
    %c0_i32 = arith.constant 0 : i32
    %c0_i32_0 = arith.constant 0 : i32
    return %arg0, %c0_i32 : i32, i32
  }
}

</mosaic_0001>

<llo_original>
// kernel: tpu_custom_call.1
$region0: #{tpu_custom_call.1}
  #allocation0 [shape = 'u32[]', space=smem, size = 0x4, offset = 0x4, fixed_abs, tag = 'smem constant byte address 0x4 - core index']
  #allocation1 [shape = 'u32[144,128]{1,0:T(1,128)}', space=vmem, size = 0x12000, scoped, tag = 'internal scratch']
  %s0 = inlined_call_operand.vmem [shape: f32[64,8], index: 0, kind: input, shape index: {}]
  %s1 = inlined_call_operand.vmem [shape: f32[8,24], index: 1, kind: input, shape index: {}]
  %s2 = inlined_call_operand.vmem [shape: f32[8,8], index: 2, kind: input, shape index: {}]
  %s3 = inlined_call_operand.vmem [shape: f32[8,128], index: 3, kind: input, shape index: {}]
  %s4 = inlined_call_operand.vmem [shape: f32[24,128], index: 4, kind: input, shape index: {}]
  %s5 = inlined_call_operand.vmem [shape: f32[1,128], index: 5, kind: input, shape index: {}]
  %s6 = inlined_call_operand.hbm [shape: f32[128,128], index: 6, kind: input, shape index: {}]
  %s7 = inlined_call_operand.vmem [shape: f32[1,128], index: 7, kind: input, shape index: {}]
  %s8 = inlined_call_operand.hbm [shape: f32[8,128], index: 8, kind: output, shape index: {}]
  %s9 = sld [smem:[#allocation0]]
  $region46: #{tpu_custom_call.1} parent=0
    _
  %s11 = ssub.s32 1, %s9
  %s12 = scalar_select 0, %s11, %s9
  $region1: #{tpu_custom_call.1} parent=0
    #allocation2 [shape = 'u8[65536]{0}', space=vmem, size = 0x10000, scoped, tag = 'input window, operand 6, single buffered']
    #allocation3 [shape = 's32[1]{0}', space=sflag, size = 0x4, scoped, tag = 'scoped memory for tpu_custom_call.1']
    #allocation4 [shape = 's32[1]{0}', space=sflag, size = 0x4, scoped, tag = 'scoped memory for tpu_custom_call.1']
    #allocation5 [shape = 'u8[4096]{0}', space=vmem, size = 0x1000, scoped, tag = 'output window, operand 0, single buffered']
    %13 = vsyncpa [#allocation3], 0
    %14 = vsyncpa [#allocation4], 0
    // Predicated region
    $region2: #{tpu_custom_call.1} parent=1 // pred_check
      _
    $region3: #{tpu_custom_call.1} parent=1 // pred_check_branch
      %16 = sbr.rel (0) target = $region5
    $region4: #{tpu_custom_call.1} parent=1 // pred_region
      _
    $region5: #{tpu_custom_call.1} parent=1 // pred_fallthru
      _
    // Predicated region
    $region6: #{tpu_custom_call.1} parent=1 // pred_check
      _
    $region7: #{tpu_custom_call.1} parent=1 // pred_check_branch
      %18 = sbr.rel (0) target = $region9
    $region8: #{tpu_custom_call.1} parent=1 // pred_region
      _
    $region9: #{tpu_custom_call.1} parent=1 // pred_fallthru
      _
    // Predicated region
    $region10: #{tpu_custom_call.1} parent=1 // pred_check
      _
    $region11: #{tpu_custom_call.1} parent=1 // pred_check_branch
      %20 = sbr.rel (0) target = $region13
    $region12: #{tpu_custom_call.1} parent=1 // pred_region
      _
    $region13: #{tpu_custom_call.1} parent=1 // pred_fallthru
      _
    // Predicated region
    $region14: #{tpu_custom_call.1} parent=1 // pred_check
      _
    $region15: #{tpu_custom_call.1} parent=1 // pred_check_branch
      %22 = sbr.rel (0) target = $region17
    $region16: #{tpu_custom_call.1} parent=1 // pred_region
      _
    $region17: #{tpu_custom_call.1} parent=1 // pred_fallthru
      _
    // Predicated region
    $region18: #{tpu_custom_call.1} parent=1 // pred_check
      _
    $region19: #{tpu_custom_call.1} parent=1 // pred_check_branch
      %24 = sbr.rel (0) target = $region21
    $region20: #{tpu_custom_call.1} parent=1 // pred_region
      _
    $region21: #{tpu_custom_call.1} parent=1 // pred_fallthru
      _
    // Predicated region
    $region22: #{tpu_custom_call.1} parent=1 // pred_check
      _
    $region23: #{tpu_custom_call.1} parent=1 // pred_check_branch
      %26 = sbr.rel (0) target = $region25
    $region24: #{tpu_custom_call.1} parent=1 // pred_region
      _
    $region25: #{tpu_custom_call.1} parent=1 // pred_fallthru
      _
    // Predicated region
    $region26: #{tpu_custom_call.1} parent=1 // pred_check
      _
    $region27: #{tpu_custom_call.1} parent=1 // pred_check_branch
      %28 = sbr.rel (0) target = $region29
    $region28: #{tpu_custom_call.1} parent=1 // pred_region
      %s30 = ssub.s32 2048, 2048
      %31 = vsyncadd [#allocation3], %s30
      %s32 = sshll.u32 [#allocation2], 4
      %s33 = int_to_ptr.vmem [resolvable:$true] %s32
      %38 = dma.hbm_to_vmem [thread:$0]  %s6, 2048, %s33, [#allocation3], 128, 128, 8
    $region29: #{tpu_custom_call.1} parent=1 // pred_fallthru
      _
    // Predicated region
    $region30: #{tpu_custom_call.1} parent=1 // pred_check
      _
    $region31: #{tpu_custom_call.1} parent=1 // pred_check_branch
      %40 = sbr.rel (0) target = $region33
    $region32: #{tpu_custom_call.1} parent=1 // pred_region
      _
    $region33: #{tpu_custom_call.1} parent=1 // pred_fallthru
      _
    // Predicated region
    $region34: #{tpu_custom_call.1} parent=1 // pred_check
      _
    $region35: #{tpu_custom_call.1} parent=1 // pred_check_branch
      %42 = sbr.rel (0) target = $region37
    $region36: #{tpu_custom_call.1} parent=1 // pred_region
      %43 = dma.done [#allocation3], 2048
    $region37: #{tpu_custom_call.1} parent=1 // pred_fallthru
      _
    %v44 = vld [vmem:[%s0] sm:$0xff]
    %v45 = vld [vmem:[%s0 + $0x8] sm:$0xff]
    %v46 = vld [vmem:[%s0 + $0x10] sm:$0xff]
    %v47 = vld [vmem:[%s0 + $0x18] sm:$0xff]
    %v48 = vld [vmem:[%s0 + $0x20] sm:$0xff]
    %v49 = vld [vmem:[%s0 + $0x28] sm:$0xff]
    %v50 = vld [vmem:[%s0 + $0x30] sm:$0xff]
    %v51 = vld [vmem:[%s0 + $0x38] sm:$0xff]
    %v52 = vld [vmem:[%s3] sm:$0xff]
    %vm53 = vcmask 64512
    %v55 = vsel %vm53, %v44, 0
    %v58 = vsel %vm53, %v45, 0
    %v61 = vsel %vm53, %v46, 0
    %v64 = vsel %vm53, %v47, 0
    %v67 = vsel %vm53, %v48, 0
    %v70 = vsel %vm53, %v49, 0
    %v73 = vsel %vm53, %v50, 0
    %v76 = vsel %vm53, %v51, 0
    %78 = vmatprep.subr.mxu0 0.0
    %79 = vmatpush1.msra.mxu0 %v52
    %80 = vmatprep.subr.mxu0 0.0
    %81 = vmatpush1.msra.mxu0 0.0
    %82 = vmatprep.subr.mxu0 0.0
    %83 = vmatpush1.msra.mxu0 0.0
    %84 = vmatprep.subr.mxu0 0.0
    %85 = vmatpush1.msra.mxu0 0.0
    %86 = vmatprep.subr.mxu0 0.0
    %87 = vmatpush1.msra.mxu0 0.0
    %88 = vmatprep.subr.mxu0 0.0
    %89 = vmatpush1.msra.mxu0 0.0
    %90 = vmatprep.subr.mxu0 0.0
    %91 = vmatpush1.msra.mxu0 0.0
    %92 = vmatprep.subr.mxu0 0.0
    %93 = vmatpush1.msra.mxu0 0.0
    %94 = vmatprep.subr.mxu0 0.0
    %95 = vmatpush1.msra.mxu0 0.0
    %96 = vmatprep.subr.mxu0 0.0
    %97 = vmatpush1.msra.mxu0 0.0
    %98 = vmatprep.subr.mxu0 0.0
    %99 = vmatpush1.msra.mxu0 0.0
    %100 = vmatprep.subr.mxu0 0.0
    %101 = vmatpush1.msra.mxu0 0.0
    %102 = vmatprep.subr.mxu0 0.0
    %103 = vmatpush1.msra.mxu0 0.0
    %104 = vmatprep.subr.mxu0 0.0
    %105 = vmatpush1.msra.mxu0 0.0
    %106 = vmatprep.subr.mxu0 0.0
    %107 = vmatpush1.msra.mxu0 0.0
    %108 = vmatprep.subr.mxu0 0.0
    %109 = vmatpush1.msra.mxu0 0.0
    %110 = vmatprep.subr.mxu0 0.0
    %111 = vmatpush1.msra.mxu0 0.0
    %112 = vmatprep.subr.mxu0 0.0
    %113 = vmatpush1.msra.mxu0 0.0
    %114 = vmatprep.subr.mxu0 0.0
    %115 = vmatpush1.msra.mxu0 0.0
    %116 = vmatprep.subr.mxu0 0.0
    %117 = vmatpush1.msra.mxu0 0.0
    %118 = vmatprep.subr.mxu0 0.0
    %119 = vmatpush1.msra.mxu0 0.0
    %120 = vmatprep.subr.mxu0 0.0
    %121 = vmatpush1.msra.mxu0 0.0
    %122 = vmatprep.subr.mxu0 0.0
    %123 = vmatpush1.msra.mxu0 0.0
    %124 = vmatprep.subr.mxu0 0.0
    %125 = vmatpush1.msra.mxu0 0.0
    %126 = vmatprep.subr.mxu0 0.0
    %127 = vmatpush1.msra.mxu0 0.0
    %128 = vmatprep.subr.mxu0 0.0
    %129 = vmatpush1.msra.mxu0 0.0
    %130 = vmatprep.subr.mxu0 0.0
    %131 = vmatpush1.msra.mxu0 0.0
    %132 = vmatprep.subr.mxu0 0.0
    %133 = vmatpush1.msra.mxu0 0.0
    %134 = vmatprep.subr.mxu0 0.0
    %135 = vmatpush1.msra.mxu0 0.0
    %136 = vmatprep.subr.mxu0 0.0
    %137 = vmatpush1.msra.mxu0 0.0
    %138 = vmatprep.subr.mxu0 0.0
    %139 = vmatpush1.msra.mxu0 0.0
    %140 = vmatprep.subr.mxu0 0.0
    %141 = vmatpush1.msra.mxu0 0.0
    %142 = vmatprep.mubr.f32.mxu0 0.0
    %143 = vmatmul.mubr.f32.gmra.mrb[0].mxu0 %v55
    %v144 = vpop.f32.mrb[0].mxu0
    %v145 = vadd.f32 0.0, %v144
    %v146 = vpop.f32.mrb[0].mxu0
    %147 = vmatprep.mubr.f32.mxu0 0.0
    %148 = vmatmul.mubr.f32.gmra.mrb[0].mxu0 %v58
    %v149 = vpop.f32.mrb[0].mxu0
    %v150 = vadd.f32 0.0, %v149
    %v151 = vpop.f32.mrb[0].mxu0
    %152 = vmatprep.mubr.f32.mxu0 0.0
    %153 = vmatmul.mubr.f32.gmra.mrb[0].mxu0 %v61
    %v154 = vpop.f32.mrb[0].mxu0
    %v155 = vadd.f32 0.0, %v154
    %v156 = vpop.f32.mrb[0].mxu0
    %157 = vmatprep.mubr.f32.mxu0 0.0
    %158 = vmatmul.mubr.f32.gmra.mrb[0].mxu0 %v64
    %v159 = vpop.f32.mrb[0].mxu0
    %v160 = vadd.f32 0.0, %v159
    %v161 = vpop.f32.mrb[0].mxu0
    %162 = vmatprep.mubr.f32.mxu0 0.0
    %163 = vmatmul.mubr.f32.gmra.mrb[0].mxu0 %v67
    %v164 = vpop.f32.mrb[0].mxu0
    %v165 = vadd.f32 0.0, %v164
    %v166 = vpop.f32.mrb[0].mxu0
    %167 = vmatprep.mubr.f32.mxu0 0.0
    %168 = vmatmul.mubr.f32.gmra.mrb[0].mxu0 %v70
    %v169 = vpop.f32.mrb[0].mxu0
    %v170 = vadd.f32 0.0, %v169
    %v171 = vpop.f32.mrb[0].mxu0
    %172 = vmatprep.mubr.f32.mxu0 0.0
    %173 = vmatmul.mubr.f32.gmra.mrb[0].mxu0 %v73
    %v174 = vpop.f32.mrb[0].mxu0
    %v175 = vadd.f32 0.0, %v174
    %v176 = vpop.f32.mrb[0].mxu0
    %177 = vmatprep.mubr.f32.mxu0 0.0
    %178 = vmatmul.mubr.f32.gmra.mrb[0].mxu0 %v76
    %v179 = vpop.f32.mrb[0].mxu0
    %v180 = vadd.f32 0.0, %v179
    %v181 = vpop.f32.mrb[0].mxu0
    %182 = vdwg.mxu0
    %v183 = vld [vmem:[%s1] sm:$0xff]
    %v184 = vld [vmem:[%s4] sm:$0xff]
    %v185 = vld [vmem:[%s4 + $0x8] sm:$0xff]
    %v186 = vld [vmem:[%s4 + $0x10] sm:$0xff]
    %v187 = vld [vmem:[%s5] sm:$0x1]
    %v189 = vlaneseq
    %v190 = vshrl.u32 %v189, 7
    %v191 = vsub.s32 0, %v190
    %v192 = vrot.slane %v187, %v191
    %vm194 = vcmask 195584
    %v196 = vsel %vm194, %v183, 0
    %198 = vmatprep.subr.mxu0 0.0
    %199 = vmatpush1.msra.mxu0 %v184
    %200 = vmatprep.subr.mxu0 0.0
    %201 = vmatpush1.msra.mxu0 %v185
    %202 = vmatprep.subr.mxu0 0.0
    %203 = vmatpush1.msra.mxu0 %v186
    %204 = vmatprep.subr.mxu0 0.0
    %205 = vmatpush1.msra.mxu0 0.0
    %206 = vmatprep.subr.mxu0 0.0
    %207 = vmatpush1.msra.mxu0 0.0
    %208 = vmatprep.subr.mxu0 0.0
    %209 = vmatpush1.msra.mxu0 0.0
    %210 = vmatprep.subr.mxu0 0.0
    %211 = vmatpush1.msra.mxu0 0.0
    %212 = vmatprep.subr.mxu0 0.0
    %213 = vmatpush1.msra.mxu0 0.0
    %214 = vmatprep.subr.mxu0 0.0
    %215 = vmatpush1.msra.mxu0 0.0
    %216 = vmatprep.subr.mxu0 0.0
    %217 = vmatpush1.msra.mxu0 0.0
    %218 = vmatprep.subr.mxu0 0.0
    %219 = vmatpush1.msra.mxu0 0.0
    %220 = vmatprep.subr.mxu0 0.0
    %221 = vmatpush1.msra.mxu0 0.0
    %222 = vmatprep.subr.mxu0 0.0
    %223 = vmatpush1.msra.mxu0 0.0
    %224 = vmatprep.subr.mxu0 0.0
    %225 = vmatpush1.msra.mxu0 0.0
    %226 = vmatprep.subr.mxu0 0.0
    %227 = vmatpush1.msra.mxu0 0.0
    %228 = vmatprep.subr.mxu0 0.0
    %229 = vmatpush1.msra.mxu0 0.0
    %230 = vmatprep.subr.mxu0 0.0
    %231 = vmatpush1.msra.mxu0 0.0
    %232 = vmatprep.subr.mxu0 0.0
    %233 = vmatpush1.msra.mxu0 0.0
    %234 = vmatprep.subr.mxu0 0.0
    %235 = vmatpush1.msra.mxu0 0.0
    %236 = vmatprep.subr.mxu0 0.0
    %237 = vmatpush1.msra.mxu0 0.0
    %238 = vmatprep.subr.mxu0 0.0
    %239 = vmatpush1.msra.mxu0 0.0
    %240 = vmatprep.subr.mxu0 0.0
    %241 = vmatpush1.msra.mxu0 0.0
    %242 = vmatprep.subr.mxu0 0.0
    %243 = vmatpush1.msra.mxu0 0.0
    %244 = vmatprep.subr.mxu0 0.0
    %245 = vmatpush1.msra.mxu0 0.0
    %246 = vmatprep.subr.mxu0 0.0
    %247 = vmatpush1.msra.mxu0 0.0
    %248 = vmatprep.subr.mxu0 0.0
    %249 = vmatpush1.msra.mxu0 0.0
    %250 = vmatprep.subr.mxu0 0.0
    %251 = vmatpush1.msra.mxu0 0.0
    %252 = vmatprep.subr.mxu0 0.0
    %253 = vmatpush1.msra.mxu0 0.0
    %254 = vmatprep.subr.mxu0 0.0
    %255 = vmatpush1.msra.mxu0 0.0
    %256 = vmatprep.subr.mxu0 0.0
    %257 = vmatpush1.msra.mxu0 0.0
    %258 = vmatprep.subr.mxu0 0.0
    %259 = vmatpush1.msra.mxu0 0.0
    %260 = vmatprep.subr.mxu0 0.0
    %261 = vmatpush1.msra.mxu0 0.0
    %262 = vmatprep.mubr.f32.mxu0 0.0
    %263 = vmatmul.mubr.f32.gmra.mrb[0].mxu0 %v196
    %v264 = vpop.f32.mrb[0].mxu0
    %v265 = vadd.f32 %v192, %v264
    %v266 = vpop.f32.mrb[0].mxu0
    %267 = vdwg.mxu0
    %v269 = vcombine.high %v265, %v265
    %v271 = vunpack.c.l.s4 1966171168
    %v272 = vunpack.c.0.s8 %v271
    %v273 = vlaneseq
    %v274 = vshrl.u32 %v273, 7
    %v275 = vsub.s32 %v272, %v274
    %v276 = vrot.slane %v265, %v275
    %v278 = vunpack.c.l.s4 1966171168
    %v279 = vunpack.c.0.s8 %v278
    %v280 = vlaneseq
    %v281 = vshrl.u32 %v280, 7
    %v282 = vsub.s32 %v279, %v281
    %v283 = vrot.slane %v269, %v282
    %v284 = vcombine.high %v276, %v276
    %v285 = vcombine.high %v283, %v283
    %v287 = vunpack.c.l.s4 1966171168
    %v288 = vunpack.c.0.s8 %v287
    %v289 = vlaneseq
    %v290 = vshrl.u32 %v289, 7
    %v291 = vsub.s32 %v288, %v290
    %v292 = vrot.slane %v276, %v291
    %v294 = vunpack.c.l.s4 1966171168
    %v295 = vunpack.c.0.s8 %v294
    %v296 = vlaneseq
    %v297 = vshrl.u32 %v296, 7
    %v298 = vsub.s32 %v295, %v297
    %v299 = vrot.slane %v283, %v298
    %v301 = vunpack.c.l.s4 1966171168
    %v302 = vunpack.c.0.s8 %v301
    %v303 = vlaneseq
    %v304 = vshrl.u32 %v303, 7
    %v305 = vsub.s32 %v302, %v304
    %v306 = vrot.slane %v284, %v305
    %v308 = vunpack.c.l.s4 1966171168
    %v309 = vunpack.c.0.s8 %v308
    %v310 = vlaneseq
    %v311 = vshrl.u32 %v310, 7
    %v312 = vsub.s32 %v309, %v311
    %v313 = vrot.slane %v285, %v312
    %v314 = vcombine.high %v292, %v292
    %v315 = vcombine.high %v299, %v299
    %v316 = vcombine.high %v306, %v306
    %v317 = vcombine.high %v313, %v313
    %v318 = vlaneseq
    %v319 = vshrl.u32 %v318, 7
    %v320 = vsub.s32 0, %v319
    %v321 = vrot.slane %v292, %v320
    %v322 = vlaneseq
    %v323 = vshrl.u32 %v322, 7
    %v324 = vsub.s32 0, %v323
    %v325 = vrot.slane %v306, %v324
    %v326 = vlaneseq
    %v327 = vshrl.u32 %v326, 7
    %v328 = vsub.s32 0, %v327
    %v329 = vrot.slane %v314, %v328
    %v330 = vlaneseq
    %v331 = vshrl.u32 %v330, 7
    %v332 = vsub.s32 0, %v331
    %v333 = vrot.slane %v316, %v332
    %v334 = vlaneseq
    %v335 = vshrl.u32 %v334, 7
    %v336 = vsub.s32 0, %v335
    %v337 = vrot.slane %v299, %v336
    %v338 = vlaneseq
    %v339 = vshrl.u32 %v338, 7
    %v340 = vsub.s32 0, %v339
    %v341 = vrot.slane %v313, %v340
    %v342 = vlaneseq
    %v343 = vshrl.u32 %v342, 7
    %v344 = vsub.s32 0, %v343
    %v345 = vrot.slane %v315, %v344
    %v346 = vlaneseq
    %v347 = vshrl.u32 %v346, 7
    %v348 = vsub.s32 0, %v347
    %v349 = vrot.slane %v317, %v348
    %v358 = vadd.f32 %v145, %v321
    %v359 = vadd.f32 %v150, %v325
    %v360 = vadd.f32 %v155, %v329
    %v361 = vadd.f32 %v160, %v333
    %v362 = vadd.f32 %v165, %v337
    %v363 = vadd.f32 %v170, %v341
    %v364 = vadd.f32 %v175, %v345
    %v365 = vadd.f32 %v180, %v349
    %v366 = vmax.f32 %v358, 0.0
    %v367 = vmax.f32 %v359, 0.0
    %v368 = vmax.f32 %v360, 0.0
    %v369 = vmax.f32 %v361, 0.0
    %v370 = vmax.f32 %v362, 0.0
    %v371 = vmax.f32 %v363, 0.0
    %v372 = vmax.f32 %v364, 0.0
    %v373 = vmax.f32 %v365, 0.0
    %v374 = vld [vmem:[%s2] sm:$0xff]
    %v375 = vlaneseq
    %v376 = vshrl.u32 %v375, 7
    %v377 = vsub.s32 0, %v376
    %v378 = vrot.slane %v374, %v377
    %380 = vbcast.lane.b32.xlu0 %v378, 256
    %v381 = vpop.permute.xlu0 %380
    %v382 = vlaneseq
    %v383 = vshrl.u32 %v382, 7
    %v384 = vsub.s32 1, %v383
    %v385 = vrot.slane %v374, %v384
    %387 = vbcast.lane.b32.xlu0 %v385, 256
    %v388 = vpop.permute.xlu0 %387
    %v389 = vlaneseq
    %v390 = vshrl.u32 %v389, 7
    %v391 = vsub.s32 2, %v390
    %v392 = vrot.slane %v374, %v391
    %394 = vbcast.lane.b32.xlu0 %v392, 256
    %v395 = vpop.permute.xlu0 %394
    %v396 = vlaneseq
    %v397 = vshrl.u32 %v396, 7
    %v398 = vsub.s32 3, %v397
    %v399 = vrot.slane %v374, %v398
    %401 = vbcast.lane.b32.xlu0 %v399, 256
    %v402 = vpop.permute.xlu0 %401
    %v403 = vlaneseq
    %v404 = vshrl.u32 %v403, 7
    %v405 = vsub.s32 4, %v404
    %v406 = vrot.slane %v374, %v405
    %408 = vbcast.lane.b32.xlu0 %v406, 256
    %v409 = vpop.permute.xlu0 %408
    %v410 = vlaneseq
    %v411 = vshrl.u32 %v410, 7
    %v412 = vsub.s32 5, %v411
    %v413 = vrot.slane %v374, %v412
    %415 = vbcast.lane.b32.xlu0 %v413, 256
    %v416 = vpop.permute.xlu0 %415
    %v417 = vlaneseq
    %v418 = vshrl.u32 %v417, 7
    %v419 = vsub.s32 6, %v418
    %v420 = vrot.slane %v374, %v419
    %422 = vbcast.lane.b32.xlu0 %v420, 256
    %v423 = vpop.permute.xlu0 %422
    %v424 = vlaneseq
    %v425 = vshrl.u32 %v424, 7
    %v426 = vsub.s32 7, %v425
    %v427 = vrot.slane %v374, %v426
    %429 = vbcast.lane.b32.xlu0 %v427, 256
    %v430 = vpop.permute.xlu0 %429
    %v431 = vmul.f32 %v366, %v381
    %v432 = vmul.f32 %v367, %v388
    %v433 = vmul.f32 %v368, %v395
    %v434 = vmul.f32 %v369, %v402
    %v435 = vmul.f32 %v370, %v409
    %v436 = vmul.f32 %v371, %v416
    %v437 = vmul.f32 %v372, %v423
    %v438 = vmul.f32 %v373, %v430
    %v439 = vrot.slane %v431, 4
    %v440 = vadd.f32 %v431, %v439
    %v441 = vrot.slane %v440, 2
    %v442 = vadd.f32 %v440, %v441
    %v443 = vrot.slane %v442, 1
    %v444 = vadd.f32 %v442, %v443
    %v445 = vrot.slane %v432, 4
    %v446 = vadd.f32 %v432, %v445
    %v447 = vrot.slane %v446, 2
    %v448 = vadd.f32 %v446, %v447
    %v449 = vrot.slane %v448, 1
    %v450 = vadd.f32 %v448, %v449
    %v451 = vrot.slane %v433, 4
    %v452 = vadd.f32 %v433, %v451
    %v453 = vrot.slane %v452, 2
    %v454 = vadd.f32 %v452, %v453
    %v455 = vrot.slane %v454, 1
    %v456 = vadd.f32 %v454, %v455
    %v457 = vrot.slane %v434, 4
    %v458 = vadd.f32 %v434, %v457
    %v459 = vrot.slane %v458, 2
    %v460 = vadd.f32 %v458, %v459
    %v461 = vrot.slane %v460, 1
    %v462 = vadd.f32 %v460, %v461
    %v463 = vrot.slane %v435, 4
    %v464 = vadd.f32 %v435, %v463
    %v465 = vrot.slane %v464, 2
    %v466 = vadd.f32 %v464, %v465
    %v467 = vrot.slane %v466, 1
    %v468 = vadd.f32 %v466, %v467
    %v469 = vrot.slane %v436, 4
    %v470 = vadd.f32 %v436, %v469
    %v471 = vrot.slane %v470, 2
    %v472 = vadd.f32 %v470, %v471
    %v473 = vrot.slane %v472, 1
    %v474 = vadd.f32 %v472, %v473
    %v475 = vrot.slane %v437, 4
    %v476 = vadd.f32 %v437, %v475
    %v477 = vrot.slane %v476, 2
    %v478 = vadd.f32 %v476, %v477
    %v479 = vrot.slane %v478, 1
    %v480 = vadd.f32 %v478, %v479
    %v481 = vrot.slane %v438, 4
    %v482 = vadd.f32 %v438, %v481
    %v483 = vrot.slane %v482, 2
    %v484 = vadd.f32 %v482, %v483
    %v485 = vrot.slane %v484, 1
    %v486 = vadd.f32 %v484, %v485
    %v487 = vsel %vm53, %v374, 0.0
    %488 = vadd.xlane.f32.xlu0 %v487
    %v489 = vpop.xlane.xlu0 %488
    %v490 = vld [vmem:[#allocation2] sm:$0xff]
    %v491 = vld [vmem:[#allocation2 + $0x8] sm:$0xff]
    %v492 = vld [vmem:[#allocation2 + $0x10] sm:$0xff]
    %v493 = vld [vmem:[#allocation2 + $0x18] sm:$0xff]
    %v494 = vld [vmem:[#allocation2 + $0x20] sm:$0xff]
    %v495 = vld [vmem:[#allocation2 + $0x28] sm:$0xff]
    %v496 = vld [vmem:[#allocation2 + $0x30] sm:$0xff]
    %v497 = vld [vmem:[#allocation2 + $0x38] sm:$0xff]
    %v498 = vld [vmem:[#allocation2 + $0x40] sm:$0xff]
    %v499 = vld [vmem:[#allocation2 + $0x48] sm:$0xff]
    %v500 = vld [vmem:[#allocation2 + $0x50] sm:$0xff]
    %v501 = vld [vmem:[#allocation2 + $0x58] sm:$0xff]
    %v502 = vld [vmem:[#allocation2 + $0x60] sm:$0xff]
    %v503 = vld [vmem:[#allocation2 + $0x68] sm:$0xff]
    %v504 = vld [vmem:[#allocation2 + $0x70] sm:$0xff]
    %v505 = vld [vmem:[#allocation2 + $0x78] sm:$0xff]
    %v506 = vld [vmem:[%s7] sm:$0x1]
    %v508 = vlaneseq
    %v509 = vshrl.u32 %v508, 7
    %v510 = vsub.s32 0, %v509
    %v511 = vrot.slane %v506, %v510
    %v513 = vmul.f32 %v489, %v511
    %vm522 = vcmask 1041409
    %v523 = vsel %vm522, %v450, %v444
    %vm524 = vcmask 1042434
    %v525 = vsel %vm524, %v456, %v523
    %vm526 = vcmask 1043459
    %v527 = vsel %vm526, %v462, %v525
    %vm528 = vcmask 1044484
    %v529 = vsel %vm528, %v468, %v527
    %vm530 = vcmask 1045509
    %v531 = vsel %vm530, %v474, %v529
    %vm532 = vcmask 1046534
    %v533 = vsel %vm532, %v480, %v531
    %vm534 = vcmask 1047559
    %v535 = vsel %vm534, %v486, %v533
    %537 = vmatprep.subr.mxu0 0.0
    %538 = vmatpush1.msra.mxu0 %v490
    %539 = vmatprep.subr.mxu0 0.0
    %540 = vmatpush1.msra.mxu0 %v491
    %541 = vmatprep.subr.mxu0 0.0
    %542 = vmatpush1.msra.mxu0 %v492
    %543 = vmatprep.subr.mxu0 0.0
    %544 = vmatpush1.msra.mxu0 %v493
    %545 = vmatprep.subr.mxu0 0.0
    %546 = vmatpush1.msra.mxu0 %v494
    %547 = vmatprep.subr.mxu0 0.0
    %548 = vmatpush1.msra.mxu0 %v495
    %549 = vmatprep.subr.mxu0 0.0
    %550 = vmatpush1.msra.mxu0 %v496
    %551 = vmatprep.subr.mxu0 0.0
    %552 = vmatpush1.msra.mxu0 %v497
    %553 = vmatprep.subr.mxu0 0.0
    %554 = vmatpush1.msra.mxu0 %v498
    %555 = vmatprep.subr.mxu0 0.0
    %556 = vmatpush1.msra.mxu0 %v499
    %557 = vmatprep.subr.mxu0 0.0
    %558 = vmatpush1.msra.mxu0 %v500
    %559 = vmatprep.subr.mxu0 0.0
    %560 = vmatpush1.msra.mxu0 %v501
    %561 = vmatprep.subr.mxu0 0.0
    %562 = vmatpush1.msra.mxu0 %v502
    %563 = vmatprep.subr.mxu0 0.0
    %564 = vmatpush1.msra.mxu0 %v503
    %565 = vmatprep.subr.mxu0 0.0
    %566 = vmatpush1.msra.mxu0 %v504
    %567 = vmatprep.subr.mxu0 0.0
    %568 = vmatpush1.msra.mxu0 %v505
    %569 = vmatprep.subr.mxu0 0.0
    %570 = vmatpush1.msra.mxu0 0.0
    %571 = vmatprep.subr.mxu0 0.0
    %572 = vmatpush1.msra.mxu0 0.0
    %573 = vmatprep.subr.mxu0 0.0
    %574 = vmatpush1.msra.mxu0 0.0
    %575 = vmatprep.subr.mxu0 0.0
    %576 = vmatpush1.msra.mxu0 0.0
    %577 = vmatprep.subr.mxu0 0.0
    %578 = vmatpush1.msra.mxu0 0.0
    %579 = vmatprep.subr.mxu0 0.0
    %580 = vmatpush1.msra.mxu0 0.0
    %581 = vmatprep.subr.mxu0 0.0
    %582 = vmatpush1.msra.mxu0 0.0
    %583 = vmatprep.subr.mxu0 0.0
    %584 = vmatpush1.msra.mxu0 0.0
    %585 = vmatprep.subr.mxu0 0.0
    %586 = vmatpush1.msra.mxu0 0.0
    %587 = vmatprep.subr.mxu0 0.0
    %588 = vmatpush1.msra.mxu0 0.0
    %589 = vmatprep.subr.mxu0 0.0
    %590 = vmatpush1.msra.mxu0 0.0
    %591 = vmatprep.subr.mxu0 0.0
    %592 = vmatpush1.msra.mxu0 0.0
    %593 = vmatprep.subr.mxu0 0.0
    %594 = vmatpush1.msra.mxu0 0.0
    %595 = vmatprep.subr.mxu0 0.0
    %596 = vmatpush1.msra.mxu0 0.0
    %597 = vmatprep.subr.mxu0 0.0
    %598 = vmatpush1.msra.mxu0 0.0
    %599 = vmatprep.subr.mxu0 0.0
    %600 = vmatpush1.msra.mxu0 0.0
    %601 = vmatprep.mubr.f32.mxu0 0.0
    %602 = vmatmul.mubr.f32.gmra.mrb[0].mxu0 %v535
    %v603 = vpop.f32.mrb[0].mxu0
    %v604 = vadd.f32 %v513, %v603
    %v605 = vpop.f32.mrb[0].mxu0
    %606 = vdwg.mxu0
    %607 = vst [vmem:[#allocation5] sm:$0xff] %v604
    // Predicated region
    $region38: #{tpu_custom_call.1} parent=1 // pred_check
      _
    $region39: #{tpu_custom_call.1} parent=1 // pred_check_branch
      %609 = sbr.rel (0) target = $region41
    $region40: #{tpu_custom_call.1} parent=1 // pred_region
      %s611 = ssub.s32 128, 128
      %612 = vsyncadd [#allocation4], %s611
      %s614 = sshll.u32 [#allocation5], 4
      %s615 = int_to_ptr.vmem [resolvable:$true] %s614
      %617 = dma.vmem_to_hbm [thread:$0]  %s615, 128, %s8, [#allocation4]
    $region41: #{tpu_custom_call.1} parent=1 // pred_fallthru
      _
    // Predicated region
    $region42: #{tpu_custom_call.1} parent=1 // pred_check
      _
    $region43: #{tpu_custom_call.1} parent=1 // pred_check_branch
      %619 = sbr.rel (0) target = $region45
    $region44: #{tpu_custom_call.1} parent=1 // pred_region
      %620 = dma.done [#allocation4], 128
    $region45: #{tpu_custom_call.1} parent=1 // pred_fallthru
      _
    %621 = vsyncpa [#allocation3], 1
    %622 = vsyncpa [#allocation4], 1

</llo_original>
